<compile_context>
chip_gen: v6e
topology: v6e:2x2x1
jax: 0.10.0
libtpu: 0.0.40
codegen_flags: <defaults>
</compile_context>

<pallas_src>
import functools
import math

import jax
import jax.numpy as jnp
from jax.experimental import pallas as pl
from jax.experimental.pallas import tpu as pltpu

_LANE = 128


def _cdiv(a, b):
    return -(-a // b)


def _round_up(x, m):
    return _cdiv(x, m) * m


def _pad_to(x, shape):
    pads = [(0, t - s) for s, t in zip(x.shape, shape)]
    if all(p == (0, 0) for p in pads):
        return x
    return jnp.pad(x, pads)


@functools.lru_cache(maxsize=1)
def _vmem_cap_bytes():
    """Generation-aware ceiling for the scoped-VMEM request."""
    try:
        phys = int(pltpu.get_tpu_info().vmem_capacity_bytes)
    except Exception:
        phys = 64 * 2**20  # conservative fallback (v7x-sized)
    # v7x: 64 MiB/TC -> keep headroom.  v5e/v6e: 128 MiB -> allow a larger scoped request.
    return 48 * 2**20 if phys <= 64 * 2**20 else 100 * 2**20


def init_generator_params(key, dim_z, dims_h, out_height, out_width):
    """PyTorch-style uniform(-1/sqrt(fan_in), +1/sqrt(fan_in)) init.

    Weights stored as (in_features, out_features) so the kernel does x @ W + b.
    Biases stored as (1, out_features) so they are 2-D on TPU.
    """
    sizes = [dim_z] + list(dims_h) + [out_height * out_width]
    params = []
    for i in range(len(sizes) - 1):
        fan_in, fan_out = sizes[i], sizes[i + 1]
        key, kw, kb = jax.random.split(key, 3)
        bound = 1.0 / math.sqrt(fan_in)
        w = jax.random.uniform(kw, (fan_in, fan_out), jnp.float32, -bound, bound)
        b = jax.random.uniform(kb, (1, fan_out), jnp.float32, -bound, bound)
        params.append((w, b))
    return params


def prepare_generator_params(params, matmul_dtype=jnp.bfloat16):
    """One-time parameter preparation (hoisted out of the per-call forward).

    Pads every layer's output width up to a multiple of 128 and casts the weight matrices
    to `matmul_dtype` so the kernel DMAs MXU-ready operands straight from HBM.  Biases stay
    f32 for the VPU bias-add.  Returns a flat tuple (w0, b0, w1, b1, ...).
    """
    dim_z = params[0][0].shape[0]
    widths = [dim_z] + [w.shape[1] for (w, _) in params]
    padded = [dim_z] + [_round_up(s, _LANE) for s in widths[1:]]
    flat = []
    for i, (w, b) in enumerate(params):
        w_p = _pad_to(w.astype(jnp.float32), (padded[i], padded[i + 1]))
        flat.append(w_p.astype(matmul_dtype))
        flat.append(_pad_to(b.astype(jnp.float32), (1, padded[i + 1])))
    return tuple(flat)


def _make_generator_kernel(n_hidden):
    """Fused MLP: Linear -> [Linear, Dropout(id), ReLU] * n_hidden -> Linear -> Sigmoid."""

    def kernel(*refs):
        # refs = (z, w0, b0, [w_i, b_i] * n_hidden, w_out, b_out, o)
        z_ref = refs[0]
        o_ref = refs[-1]
        params = refs[1:-1]

        def linear(x, w_ref, b_ref):
            # Weights are pre-cast (bf16 by default); cast the activation to match and
            # accumulate in f32 on the MXU.  Bias-add stays f32 on the VPU.
            y = jnp.dot(x.astype(w_ref.dtype), w_ref[...],
                        preferred_element_type=jnp.float32)
            return y + b_ref[...]

        # First linear, no activation (matches `out = self.linear(z)`).
        h = linear(z_ref[...], params[0], params[1])

        idx = 2
        # Hidden blocks: Linear -> Dropout (identity in eval) -> ReLU.
        for _ in range(n_hidden):
            h = jnp.maximum(linear(h, params[idx], params[idx + 1]), 0.0)
            idx += 2

        # Output head: Linear -> Sigmoid (EUP exp; effectively free next to the store).
        h = linear(h, params[idx], params[idx + 1])
        o_ref[...] = jax.nn.sigmoid(h).astype(o_ref.dtype)

    return kernel


def _choose_batch_tile(batch, block_batch):
    """Padding-aware, megacore-aware batch tile.

    Returns (tm, batch_pad) with tm a multiple of 8 and batch_pad = tm * n_tiles, keeping
    padded-row waste below 8 rows per tile (padded rows are real MXU + writeback work).
    For batch > 128 we force >= 2 tiles so both v7x TensorCores get work.
    """
    b8 = _round_up(batch, 8)
    n_tiles = _cdiv(b8, block_batch)
    if b8 > 128:
        n_tiles = max(n_tiles, 2)
    tm = _round_up(_cdiv(b8, n_tiles), 8)
    return tm, tm * n_tiles


@functools.partial(
    jax.jit, static_argnames=("out_height", "out_width", "block_batch", "out_dtype"))
def generator_forward(z, prepared_params, *, out_height, out_width, block_batch=512,
                      out_dtype=jnp.float32):
    """Fused generator forward; `prepared_params` comes from prepare_generator_params."""
    batch, dim_z = z.shape
    flat_params = tuple(prepared_params)
    assert len(flat_params) >= 4 and len(flat_params) % 2 == 0
    assert flat_params[0].shape[0] == dim_z
    n_hidden = len(flat_params) // 2 - 2
    out_dim = out_height * out_width
    out_dim_pad = flat_params[-1].shape[1]

    tm, batch_pad = _choose_batch_tile(batch, block_batch)
    z_pad = _pad_to(z.astype(jnp.float32), (batch_pad, dim_z))
    grid = (batch_pad // tm,)

    in_specs = [pl.BlockSpec((tm, dim_z), lambda i: (i, 0))]
    for p in flat_params:
        # Constant index_map -> same block every step -> fetched once, VMEM-resident.
        in_specs.append(pl.BlockSpec(p.shape, lambda i: (0, 0)))
    out_specs = pl.BlockSpec((tm, out_dim_pad), lambda i: (i, 0))

    # VMEM budget: resident weights/biases (x2 for the pipeline's default buffer pair),
    # double-buffered z/out tiles, live f32 intermediates, plus slack for internal scratch.
    out_itemsize = jnp.dtype(out_dtype).itemsize
    param_bytes = sum(int(p.size) * p.dtype.itemsize for p in flat_params)
    widest = max(int(p.shape[-1]) for p in flat_params)
    io_bytes = 2 * tm * (dim_z * 4 + out_dim_pad * out_itemsize)
    act_bytes = 2 * tm * widest * 4
    vmem_limit = int(min(_vmem_cap_bytes(),
                         max(32 * 2**20,
                             2 * param_bytes + io_bytes + act_bytes + (8 << 20))))

    out_flat = pl.pallas_call(
        _make_generator_kernel(n_hidden),
        out_shape=jax.ShapeDtypeStruct((batch_pad, out_dim_pad), out_dtype),
        grid=grid,
        in_specs=in_specs,
        out_specs=out_specs,
        compiler_params=pltpu.CompilerParams(
            dimension_semantics=("parallel",),   # megacore-shard the batch axis (v7x)
            vmem_limit_bytes=vmem_limit,
        ),
    )(z_pad, *flat_params)

    # Drop padding and match PyTorch: out.reshape(-1, 1, H, W).
    return out_flat[:batch, :out_dim].reshape(batch, 1, out_height, out_width)


def generator_reference(z, params):
    """Plain-JAX f32 reference for correctness checking."""
    w, b = params[0]
    h = z @ w + b
    for (w, b) in params[1:-1]:
        h = jnp.maximum(h @ w + b, 0.0)
    w, b = params[-1]
    return jax.nn.sigmoid(h @ w + b)


if __name__ == "__main__":
    # Small shapes consistent with the module: dim_z=32, dims_h=[64, 64], 16x16 output.
    dim_z = 32
    dims_h = [64, 64]
    out_height, out_width = 16, 16
    dropout = 0.1   # identity in eval-mode forward
    batch = 8

    key = jax.random.PRNGKey(0)
    key, kz = jax.random.split(key)
    z = jax.random.normal(kz, (batch, dim_z), jnp.float32)

    params = init_generator_params(key, dim_z, dims_h, out_height, out_width)
    ref = generator_reference(z, params).reshape(batch, 1, out_height, out_width)

    # f32-matmul path: bit-tight check against the plain-JAX reference.
    prep_f32 = prepare_generator_params(params, matmul_dtype=jnp.float32)
    out_f32 = generator_forward(z, prep_f32, out_height=out_height, out_width=out_width)
    out_f32 = jax.block_until_ready(out_f32)
    assert out_f32.shape == (batch, 1, out_height, out_width), out_f32.shape
    assert out_f32.dtype == jnp.float32
    err_f32 = float(jnp.max(jnp.abs(out_f32 - ref)))
    assert err_f32 < 1e-5, f"f32 path max abs error {err_f32}"

    # Default path: pre-padded, pre-cast bf16 weights (MXU fast path, f32 accumulation).
    prep_bf16 = prepare_generator_params(params)
    out_bf16 = generator_forward(z, prep_bf16, out_height=out_height, out_width=out_width)
    out_bf16 = jax.block_until_ready(out_bf16)
    assert out_bf16.shape == (batch, 1, out_height, out_width), out_bf16.shape
    err_bf16 = float(jnp.max(jnp.abs(out_bf16 - ref)))
    assert err_bf16 < 2e-2, f"bf16 path max abs error {err_bf16}"

    print("KERNEL_OK")
</pallas_src>

<mosaic_0001>
module attributes {stable_mosaic.version = 11 : i64} {
  func.func @kernel(%arg0: i32, %arg1: memref<8x32xf32, #tpu.memory_space<vmem>>, %arg2: memref<32x128xf32, #tpu.memory_space<vmem>>, %arg3: memref<1x128xf32, #tpu.memory_space<vmem>>, %arg4: memref<128x128xf32, #tpu.memory_space<vmem>>, %arg5: memref<1x128xf32, #tpu.memory_space<vmem>>, %arg6: memref<128x256xf32, #tpu.memory_space<vmem>>, %arg7: memref<1x256xf32, #tpu.memory_space<vmem>>, %arg8: memref<8x256xf32, #tpu.memory_space<vmem>>) attributes {dimension_semantics = [#tpu.dimension_semantics<parallel>], iteration_bounds = array<i64: 1>, scalar_prefetch = 0 : i64, scratch_operands = 0 : i64, tpu.core_type = #tpu.core_type<tc>, window_params = [{transform_indices = @transform_0, window_bounds = array<i64: 8, 32>}, {pipeline_mode = #tpu.pipeline_mode<synchronous>, transform_indices = @transform_1, window_bounds = array<i64: 32, 128>}, {pipeline_mode = #tpu.pipeline_mode<synchronous>, transform_indices = @transform_2, window_bounds = array<i64: 1, 128>}, {pipeline_mode = #tpu.pipeline_mode<synchronous>, transform_indices = @transform_3, window_bounds = array<i64: 128, 128>}, {pipeline_mode = #tpu.pipeline_mode<synchronous>, transform_indices = @transform_4, window_bounds = array<i64: 1, 128>}, {pipeline_mode = #tpu.pipeline_mode<synchronous>, transform_indices = @transform_5, window_bounds = array<i64: 128, 256>}, {pipeline_mode = #tpu.pipeline_mode<synchronous>, transform_indices = @transform_6, window_bounds = array<i64: 1, 256>}, {transform_indices = @transform_7, window_bounds = array<i64: 8, 256>}]} {
    %c0 = arith.constant 0 : index
    %c0_0 = arith.constant 0 : index
    %0 = vector.load %arg1[%c0, %c0_0] : memref<8x32xf32, #tpu.memory_space<vmem>>, vector<8x32xf32>
    %c0_1 = arith.constant 0 : index
    %c0_2 = arith.constant 0 : index
    %1 = vector.load %arg2[%c0_1, %c0_2] : memref<32x128xf32, #tpu.memory_space<vmem>>, vector<32x128xf32>
    %cst = arith.constant dense<0.000000e+00> : vector<8x128xf32>
    %2 = tpu.matmul %0, %1, %cst {dimension_numbers = #tpu.dot_dimension_numbers<[1], [0], [0], [1], [0, 0, 1, 1], [], []>} : vector<8x32xf32>, vector<32x128xf32>, vector<8x128xf32> -> vector<8x128xf32>
    %c0_3 = arith.constant 0 : index
    %c0_4 = arith.constant 0 : index
    %3 = vector.load %arg3[%c0_3, %c0_4] : memref<1x128xf32, #tpu.memory_space<vmem>>, vector<1x128xf32>
    %4 = vector.broadcast %3 : vector<1x128xf32> to vector<8x128xf32>
    %5 = arith.addf %2, %4 : vector<8x128xf32>
    %c0_5 = arith.constant 0 : index
    %c0_6 = arith.constant 0 : index
    %6 = vector.load %arg4[%c0_5, %c0_6] : memref<128x128xf32, #tpu.memory_space<vmem>>, vector<128x128xf32>
    %cst_7 = arith.constant dense<0.000000e+00> : vector<8x128xf32>
    %7 = tpu.matmul %5, %6, %cst_7 {dimension_numbers = #tpu.dot_dimension_numbers<[1], [0], [0], [1], [0, 0, 1, 1], [], []>} : vector<8x128xf32>, vector<128x128xf32>, vector<8x128xf32> -> vector<8x128xf32>
    %c0_8 = arith.constant 0 : index
    %c0_9 = arith.constant 0 : index
    %8 = vector.load %arg5[%c0_8, %c0_9] : memref<1x128xf32, #tpu.memory_space<vmem>>, vector<1x128xf32>
    %9 = vector.broadcast %8 : vector<1x128xf32> to vector<8x128xf32>
    %10 = arith.addf %7, %9 : vector<8x128xf32>
    %cst_10 = arith.constant 0.000000e+00 : f32
    %11 = vector.broadcast %cst_10 : f32 to vector<8x128xf32>
    %12 = arith.maximumf %10, %11 : vector<8x128xf32>
    %c0_11 = arith.constant 0 : index
    %c0_12 = arith.constant 0 : index
    %13 = vector.load %arg6[%c0_11, %c0_12] : memref<128x256xf32, #tpu.memory_space<vmem>>, vector<128x256xf32>
    %cst_13 = arith.constant dense<0.000000e+00> : vector<8x256xf32>
    %14 = tpu.matmul %12, %13, %cst_13 {dimension_numbers = #tpu.dot_dimension_numbers<[1], [0], [0], [1], [0, 0, 1, 1], [], []>} : vector<8x128xf32>, vector<128x256xf32>, vector<8x256xf32> -> vector<8x256xf32>
    %c0_14 = arith.constant 0 : index
    %c0_15 = arith.constant 0 : index
    %15 = vector.load %arg7[%c0_14, %c0_15] : memref<1x256xf32, #tpu.memory_space<vmem>>, vector<1x256xf32>
    %16 = vector.broadcast %15 : vector<1x256xf32> to vector<8x256xf32>
    %17 = arith.addf %14, %16 : vector<8x256xf32>
    %18 = arith.negf %17 : vector<8x256xf32>
    %19 = math.exp %18 : vector<8x256xf32>
    %cst_16 = arith.constant 1.000000e+00 : f32
    %20 = vector.broadcast %cst_16 : f32 to vector<8x256xf32>
    %21 = arith.addf %20, %19 : vector<8x256xf32>
    %22 = arith.divf %20, %21 : vector<8x256xf32>
    %c0_17 = arith.constant 0 : index
    %c0_18 = arith.constant 0 : index
    %23 = vector.load %arg8[%c0_17, %c0_18] : memref<8x256xf32, #tpu.memory_space<vmem>>, vector<8x256xf32>
    tpu.vector_store %arg8[%c0_17, %c0_18], %22 {strides = array<i32>} : memref<8x256xf32, #tpu.memory_space<vmem>>, vector<8x256xf32>,
    return
  }
  func.func @transform_0(%arg0: i32) -> (i32, i32) {
    %c0_i32 = arith.constant 0 : i32
    %c0_i32_0 = arith.constant 0 : i32
    return %arg0, %c0_i32 : i32, i32
  }
  func.func @transform_1(%arg0: i32) -> (i32, i32) {
    %c0_i32 = arith.constant 0 : i32
    %c0_i32_0 = arith.constant 0 : i32
    %c0_i32_1 = arith.constant 0 : i32
    return %c0_i32, %c0_i32_0 : i32, i32
  }
  func.func @transform_2(%arg0: i32) -> (i32, i32) {
    %c0_i32 = arith.constant 0 : i32
    %c0_i32_0 = arith.constant 0 : i32
    %c0_i32_1 = arith.constant 0 : i32
    return %c0_i32, %c0_i32_0 : i32, i32
  }
  func.func @transform_3(%arg0: i32) -> (i32, i32) {
    %c0_i32 = arith.constant 0 : i32
    %c0_i32_0 = arith.constant 0 : i32
    %c0_i32_1 = arith.constant 0 : i32
    return %c0_i32, %c0_i32_0 : i32, i32
  }
  func.func @transform_4(%arg0: i32) -> (i32, i32) {
    %c0_i32 = arith.constant 0 : i32
    %c0_i32_0 = arith.constant 0 : i32
    %c0_i32_1 = arith.constant 0 : i32
    return %c0_i32, %c0_i32_0 : i32, i32
  }
  func.func @transform_5(%arg0: i32) -> (i32, i32) {
    %c0_i32 = arith.constant 0 : i32
    %c0_i32_0 = arith.constant 0 : i32
    %c0_i32_1 = arith.constant 0 : i32
    return %c0_i32, %c0_i32_0 : i32, i32
  }
  func.func @transform_6(%arg0: i32) -> (i32, i32) {
    %c0_i32 = arith.constant 0 : i32
    %c0_i32_0 = arith.constant 0 : i32
    %c0_i32_1 = arith.constant 0 : i32
    return %c0_i32, %c0_i32_0 : i32, i32
  }
  func.func @transform_7(%arg0: i32) -> (i32, i32) {
    %c0_i32 = arith.constant 0 : i32
    %c0_i32_0 = arith.constant 0 : i32
    return %arg0, %c0_i32 : i32, i32
  }
}

</mosaic_0001>

<llo_original>
// kernel: generator_forward.1
$region0: #{generator_forward.1}
  #allocation0 [shape = 'u32[]', space=smem, size = 0x4, offset = 0x4, fixed_abs, tag = 'smem constant byte address 0x4 - core index']
  #allocation1 [shape = 'u32[144,128]{1,0:T(1,128)}', space=vmem, size = 0x12000, scoped, tag = 'internal scratch']
  %s0 = inlined_call_operand.hbm [shape: f32[8,32], index: 0, kind: input, shape index: {}]
  %s1 = inlined_call_operand.hbm [shape: f32[32,128], index: 1, kind: input, shape index: {}]
  %s2 = inlined_call_operand.vmem [shape: f32[1,128], index: 2, kind: input, shape index: {}]
  %s3 = inlined_call_operand.hbm [shape: f32[128,128], index: 3, kind: input, shape index: {}]
  %s4 = inlined_call_operand.vmem [shape: f32[1,128], index: 4, kind: input, shape index: {}]
  %s5 = inlined_call_operand.hbm [shape: f32[128,256], index: 5, kind: input, shape index: {}]
  %s6 = inlined_call_operand.vmem [shape: f32[1,256], index: 6, kind: input, shape index: {}]
  %s7 = inlined_call_operand.vmem [shape: f32[8,256], index: 7, kind: output, shape index: {}]
  %s8 = sld [smem:[#allocation0]]
  $region54: #{generator_forward.1} parent=0
    _
  %s10 = ssub.s32 1, %s8
  %s11 = scalar_select 0, %s10, %s8
  $region1: #{generator_forward.1} parent=0
    #allocation2 [shape = 'u8[4096]{0}', space=vmem, size = 0x1000, scoped, tag = 'input window, operand 0, single buffered']
    #allocation3 [shape = 's32[1]{0}', space=sflag, size = 0x4, scoped, tag = 'scoped memory for generator_forward.1']
    #allocation4 [shape = 'u8[16384]{0}', space=vmem, size = 0x4000, scoped, tag = 'input window, operand 1, single buffered']
    #allocation5 [shape = 's32[1]{0}', space=sflag, size = 0x4, scoped, tag = 'scoped memory for generator_forward.1']
    #allocation6 [shape = 'u8[65536]{0}', space=vmem, size = 0x10000, scoped, tag = 'input window, operand 3, single buffered']
    #allocation7 [shape = 'u8[131072]{0}', space=vmem, size = 0x20000, scoped, tag = 'input window, operand 5, single buffered']
    #allocation8 [shape = 's32[1]{0}', space=sflag, size = 0x4, scoped, tag = 'scoped memory for generator_forward.1']
    %12 = vsyncpa [#allocation3], 0
    %13 = vsyncpa [#allocation5], 0
    %14 = vsyncpa [#allocation8], 0
    // Predicated region
    $region2: #{generator_forward.1} parent=1 // pred_check
      _
    $region3: #{generator_forward.1} parent=1 // pred_check_branch
      %16 = sbr.rel (0) target = $region5
    $region4: #{generator_forward.1} parent=1 // pred_region
      %s18 = ssub.s32 128, 128
      %19 = vsyncadd [#allocation3], %s18
      %s21 = sshll.u32 [#allocation2], 4
      %s22 = int_to_ptr.vmem [resolvable:$true] %s21
      %24 = dma.hbm_to_vmem [thread:$0]  %s0, 128, %s22, [#allocation3]
    $region5: #{generator_forward.1} parent=1 // pred_fallthru
      _
    // Predicated region
    $region6: #{generator_forward.1} parent=1 // pred_check
      _
    $region7: #{generator_forward.1} parent=1 // pred_check_branch
      %26 = sbr.rel (0) target = $region9
    $region8: #{generator_forward.1} parent=1 // pred_region
      %s28 = ssub.s32 512, 512
      %29 = vsyncadd [#allocation5], %s28
      %s30 = sshll.u32 [#allocation4], 4
      %s31 = int_to_ptr.vmem [resolvable:$true] %s30
      %36 = dma.hbm_to_vmem [thread:$0]  %s1, 512, %s31, [#allocation5], 128, 128, 8
    $region9: #{generator_forward.1} parent=1 // pred_fallthru
      _
    // Predicated region
    $region10: #{generator_forward.1} parent=1 // pred_check
      _
    $region11: #{generator_forward.1} parent=1 // pred_check_branch
      %38 = sbr.rel (0) target = $region13
    $region12: #{generator_forward.1} parent=1 // pred_region
      _
    $region13: #{generator_forward.1} parent=1 // pred_fallthru
      _
    // Predicated region
    $region14: #{generator_forward.1} parent=1 // pred_check
      _
    $region15: #{generator_forward.1} parent=1 // pred_check_branch
      %40 = sbr.rel (0) target = $region17
    $region16: #{generator_forward.1} parent=1 // pred_region
      %s42 = ssub.s32 2048, 2048
      %43 = vsyncadd [#allocation5], %s42
      %s44 = sshll.u32 [#allocation6], 4
      %s45 = int_to_ptr.vmem [resolvable:$true] %s44
      %50 = dma.hbm_to_vmem [thread:$0]  %s3, 2048, %s45, [#allocation5], 128, 128, 8
    $region17: #{generator_forward.1} parent=1 // pred_fallthru
      _
    // Predicated region
    $region18: #{generator_forward.1} parent=1 // pred_check
      _
    $region19: #{generator_forward.1} parent=1 // pred_check_branch
      %52 = sbr.rel (0) target = $region21
    $region20: #{generator_forward.1} parent=1 // pred_region
      _
    $region21: #{generator_forward.1} parent=1 // pred_fallthru
      _
    // Predicated region
    $region22: #{generator_forward.1} parent=1 // pred_check
      _
    $region23: #{generator_forward.1} parent=1 // pred_check_branch
      %54 = sbr.rel (0) target = $region25
    $region24: #{generator_forward.1} parent=1 // pred_region
      %s56 = ssub.s32 4096, 4096
      %57 = vsyncadd [#allocation8], %s56
      %s58 = sshll.u32 [#allocation7], 4
      %s59 = int_to_ptr.vmem [resolvable:$true] %s58
      %64 = dma.hbm_to_vmem [thread:$0]  %s5, 4096, %s59, [#allocation8], 256, 256, 16
    $region25: #{generator_forward.1} parent=1 // pred_fallthru
      _
    // Predicated region
    $region26: #{generator_forward.1} parent=1 // pred_check
      _
    $region27: #{generator_forward.1} parent=1 // pred_check_branch
      %66 = sbr.rel (0) target = $region29
    $region28: #{generator_forward.1} parent=1 // pred_region
      _
    $region29: #{generator_forward.1} parent=1 // pred_fallthru
      _
    // Predicated region
    $region30: #{generator_forward.1} parent=1 // pred_check
      _
    $region31: #{generator_forward.1} parent=1 // pred_check_branch
      %68 = sbr.rel (0) target = $region33
    $region32: #{generator_forward.1} parent=1 // pred_region
      %69 = dma.done [#allocation3], 128
    $region33: #{generator_forward.1} parent=1 // pred_fallthru
      _
    // Predicated region
    $region34: #{generator_forward.1} parent=1 // pred_check
      _
    $region35: #{generator_forward.1} parent=1 // pred_check_branch
      %71 = sbr.rel (0) target = $region37
    $region36: #{generator_forward.1} parent=1 // pred_region
      %72 = dma.done [#allocation5], 512
    $region37: #{generator_forward.1} parent=1 // pred_fallthru
      _
    // Predicated region
    $region38: #{generator_forward.1} parent=1 // pred_check
      _
    $region39: #{generator_forward.1} parent=1 // pred_check_branch
      %74 = sbr.rel (0) target = $region41
    $region40: #{generator_forward.1} parent=1 // pred_region
      %75 = dma.done [#allocation5], 2048
    $region41: #{generator_forward.1} parent=1 // pred_fallthru
      _
    // Predicated region
    $region42: #{generator_forward.1} parent=1 // pred_check
      _
    $region43: #{generator_forward.1} parent=1 // pred_check_branch
      %77 = sbr.rel (0) target = $region45
    $region44: #{generator_forward.1} parent=1 // pred_region
      %78 = dma.done [#allocation8], 4096
    $region45: #{generator_forward.1} parent=1 // pred_fallthru
      _
    %v79 = vld [vmem:[#allocation2] sm:$0xff]
    %v80 = vld [vmem:[#allocation4] sm:$0xff]
    %v81 = vld [vmem:[#allocation4 + $0x8] sm:$0xff]
    %v82 = vld [vmem:[#allocation4 + $0x10] sm:$0xff]
    %v83 = vld [vmem:[#allocation4 + $0x18] sm:$0xff]
    %v84 = vld [vmem:[%s2] sm:$0x1]
    %v86 = vlaneseq
    %v87 = vshrl.u32 %v86, 7
    %v88 = vsub.s32 0, %v87
    %v89 = vrot.slane %v84, %v88
    %vm91 = vcmask 261120
    %v93 = vsel %vm91, %v79, 0
    %95 = vmatprep.subr.mxu0 0.0
    %96 = vmatpush1.msra.mxu0 0.0
    %97 = vmatprep.subr.mxu0 0.0
    %98 = vmatpush1.msra.mxu0 0.0
    %99 = vmatprep.subr.mxu0 0.0
    %100 = vmatpush1.msra.mxu0 0.0
    %101 = vmatprep.subr.mxu0 0.0
    %102 = vmatpush1.msra.mxu0 0.0
    %103 = vmatprep.subr.mxu0 0.0
    %104 = vmatpush1.msra.mxu0 0.0
    %105 = vmatprep.subr.mxu0 0.0
    %106 = vmatpush1.msra.mxu0 0.0
    %107 = vmatprep.subr.mxu0 0.0
    %108 = vmatpush1.msra.mxu0 0.0
    %109 = vmatprep.subr.mxu0 0.0
    %110 = vmatpush1.msra.mxu0 0.0
    %111 = vmatprep.subr.mxu0 0.0
    %112 = vmatpush1.msra.mxu0 0.0
    %113 = vmatprep.subr.mxu0 0.0
    %114 = vmatpush1.msra.mxu0 0.0
    %115 = vmatprep.subr.mxu0 0.0
    %116 = vmatpush1.msra.mxu0 0.0
    %117 = vmatprep.subr.mxu0 0.0
    %118 = vmatpush1.msra.mxu0 0.0
    %119 = vmatprep.subr.mxu0 0.0
    %120 = vmatpush1.msra.mxu0 %v83
    %121 = vmatprep.subr.mxu0 0.0
    %122 = vmatpush1.msra.mxu0 %v82
    %123 = vmatprep.subr.mxu0 0.0
    %124 = vmatpush1.msra.mxu0 %v81
    %125 = vmatprep.subr.mxu0 0.0
    %126 = vmatpush1.msra.mxu0 %v80
    %127 = vmatprep.subr.mxu0 0.0
    %128 = vmatpush2.msra.mxu0 0.0
    %129 = vmatprep.subr.mxu0 0.0
    %130 = vmatpush2.msra.mxu0 0.0
    %131 = vmatprep.subr.mxu0 0.0
    %132 = vmatpush2.msra.mxu0 0.0
    %133 = vmatprep.subr.mxu0 0.0
    %134 = vmatpush2.msra.mxu0 0.0
    %135 = vmatprep.subr.mxu0 0.0
    %136 = vmatpush2.msra.mxu0 0.0
    %137 = vmatprep.subr.mxu0 0.0
    %138 = vmatpush2.msra.mxu0 0.0
    %139 = vmatprep.subr.mxu0 0.0
    %140 = vmatpush2.msra.mxu0 0.0
    %141 = vmatprep.subr.mxu0 0.0
    %142 = vmatpush2.msra.mxu0 0.0
    %143 = vmatprep.subr.mxu0 0.0
    %144 = vmatpush2.msra.mxu0 0.0
    %145 = vmatprep.subr.mxu0 0.0
    %146 = vmatpush2.msra.mxu0 0.0
    %147 = vmatprep.subr.mxu0 0.0
    %148 = vmatpush2.msra.mxu0 0.0
    %149 = vmatprep.subr.mxu0 0.0
    %150 = vmatpush2.msra.mxu0 0.0
    %151 = vmatprep.subr.mxu0 0.0
    %152 = vmatpush2.msra.mxu0 0.0
    %153 = vmatprep.subr.mxu0 0.0
    %154 = vmatpush2.msra.mxu0 0.0
    %155 = vmatprep.subr.mxu0 0.0
    %156 = vmatpush2.msra.mxu0 0.0
    %157 = vmatprep.subr.mxu0 0.0
    %158 = vmatpush2.msra.mxu0 0.0
    %159 = vmatprep.mubr.f32.mxu0 0.0
    %160 = vmatmul.mubr.f32.gmra.mxu0 %v93
    %v161 = vpop.f32.mrf.mxu0
    %v162 = vadd.f32 %v89, %v161
    %v163 = vpop.f32.mrf.mxu0
    %164 = vdwg.mxu0
    %v165 = vld [vmem:[#allocation6] sm:$0xff]
    %v166 = vld [vmem:[#allocation6 + $0x8] sm:$0xff]
    %v167 = vld [vmem:[#allocation6 + $0x10] sm:$0xff]
    %v168 = vld [vmem:[#allocation6 + $0x18] sm:$0xff]
    %v169 = vld [vmem:[#allocation6 + $0x20] sm:$0xff]
    %v170 = vld [vmem:[#allocation6 + $0x28] sm:$0xff]
    %v171 = vld [vmem:[#allocation6 + $0x30] sm:$0xff]
    %v172 = vld [vmem:[#allocation6 + $0x38] sm:$0xff]
    %v173 = vld [vmem:[#allocation6 + $0x40] sm:$0xff]
    %v174 = vld [vmem:[#allocation6 + $0x48] sm:$0xff]
    %v175 = vld [vmem:[#allocation6 + $0x50] sm:$0xff]
    %v176 = vld [vmem:[#allocation6 + $0x58] sm:$0xff]
    %v177 = vld [vmem:[#allocation6 + $0x60] sm:$0xff]
    %v178 = vld [vmem:[#allocation6 + $0x68] sm:$0xff]
    %v179 = vld [vmem:[#allocation6 + $0x70] sm:$0xff]
    %v180 = vld [vmem:[#allocation6 + $0x78] sm:$0xff]
    %v181 = vld [vmem:[%s4] sm:$0x1]
    %v183 = vlaneseq
    %v184 = vshrl.u32 %v183, 7
    %v185 = vsub.s32 0, %v184
    %v186 = vrot.slane %v181, %v185
    %188 = vmatprep.subr.mxu0 0.0
    %189 = vmatpush1.msra.mxu0 %v180
    %190 = vmatprep.subr.mxu0 0.0
    %191 = vmatpush1.msra.mxu0 %v179
    %192 = vmatprep.subr.mxu0 0.0
    %193 = vmatpush1.msra.mxu0 %v178
    %194 = vmatprep.subr.mxu0 0.0
    %195 = vmatpush1.msra.mxu0 %v177
    %196 = vmatprep.subr.mxu0 0.0
    %197 = vmatpush1.msra.mxu0 %v176
    %198 = vmatprep.subr.mxu0 0.0
    %199 = vmatpush1.msra.mxu0 %v175
    %200 = vmatprep.subr.mxu0 0.0
    %201 = vmatpush1.msra.mxu0 %v174
    %202 = vmatprep.subr.mxu0 0.0
    %203 = vmatpush1.msra.mxu0 %v173
    %204 = vmatprep.subr.mxu0 0.0
    %205 = vmatpush1.msra.mxu0 %v172
    %206 = vmatprep.subr.mxu0 0.0
    %207 = vmatpush1.msra.mxu0 %v171
    %208 = vmatprep.subr.mxu0 0.0
    %209 = vmatpush1.msra.mxu0 %v170
    %210 = vmatprep.subr.mxu0 0.0
    %211 = vmatpush1.msra.mxu0 %v169
    %212 = vmatprep.subr.mxu0 0.0
    %213 = vmatpush1.msra.mxu0 %v168
    %214 = vmatprep.subr.mxu0 0.0
    %215 = vmatpush1.msra.mxu0 %v167
    %216 = vmatprep.subr.mxu0 0.0
    %217 = vmatpush1.msra.mxu0 %v166
    %218 = vmatprep.subr.mxu0 0.0
    %219 = vmatpush1.msra.mxu0 %v165
    %220 = vmatprep.subr.mxu0 0.0
    %221 = vmatpush2.msra.mxu0 0.0
    %222 = vmatprep.subr.mxu0 0.0
    %223 = vmatpush2.msra.mxu0 0.0
    %224 = vmatprep.subr.mxu0 0.0
    %225 = vmatpush2.msra.mxu0 0.0
    %226 = vmatprep.subr.mxu0 0.0
    %227 = vmatpush2.msra.mxu0 0.0
    %228 = vmatprep.subr.mxu0 0.0
    %229 = vmatpush2.msra.mxu0 0.0
    %230 = vmatprep.subr.mxu0 0.0
    %231 = vmatpush2.msra.mxu0 0.0
    %232 = vmatprep.subr.mxu0 0.0
    %233 = vmatpush2.msra.mxu0 0.0
    %234 = vmatprep.subr.mxu0 0.0
    %235 = vmatpush2.msra.mxu0 0.0
    %236 = vmatprep.subr.mxu0 0.0
    %237 = vmatpush2.msra.mxu0 0.0
    %238 = vmatprep.subr.mxu0 0.0
    %239 = vmatpush2.msra.mxu0 0.0
    %240 = vmatprep.subr.mxu0 0.0
    %241 = vmatpush2.msra.mxu0 0.0
    %242 = vmatprep.subr.mxu0 0.0
    %243 = vmatpush2.msra.mxu0 0.0
    %244 = vmatprep.subr.mxu0 0.0
    %245 = vmatpush2.msra.mxu0 0.0
    %246 = vmatprep.subr.mxu0 0.0
    %247 = vmatpush2.msra.mxu0 0.0
    %248 = vmatprep.subr.mxu0 0.0
    %249 = vmatpush2.msra.mxu0 0.0
    %250 = vmatprep.subr.mxu0 0.0
    %251 = vmatpush2.msra.mxu0 0.0
    %252 = vmatprep.mubr.f32.mxu0 0.0
    %253 = vmatmul.mubr.f32.gmra.mxu0 %v162
    %v254 = vpop.f32.mrf.mxu0
    %v255 = vadd.f32 %v186, %v254
    %v256 = vpop.f32.mrf.mxu0
    %257 = vdwg.mxu0
    %v258 = vmax.f32 %v255, 0.0
    %v259 = vld [vmem:[#allocation7] sm:$0xff]
    %v260 = vld [vmem:[#allocation7 + $0x8] sm:$0xff]
    %v261 = vld [vmem:[#allocation7 + $0x10] sm:$0xff]
    %v262 = vld [vmem:[#allocation7 + $0x18] sm:$0xff]
    %v263 = vld [vmem:[#allocation7 + $0x20] sm:$0xff]
    %v264 = vld [vmem:[#allocation7 + $0x28] sm:$0xff]
    %v265 = vld [vmem:[#allocation7 + $0x30] sm:$0xff]
    %v266 = vld [vmem:[#allocation7 + $0x38] sm:$0xff]
    %v267 = vld [vmem:[#allocation7 + $0x40] sm:$0xff]
    %v268 = vld [vmem:[#allocation7 + $0x48] sm:$0xff]
    %v269 = vld [vmem:[#allocation7 + $0x50] sm:$0xff]
    %v270 = vld [vmem:[#allocation7 + $0x58] sm:$0xff]
    %v271 = vld [vmem:[#allocation7 + $0x60] sm:$0xff]
    %v272 = vld [vmem:[#allocation7 + $0x68] sm:$0xff]
    %v273 = vld [vmem:[#allocation7 + $0x70] sm:$0xff]
    %v274 = vld [vmem:[#allocation7 + $0x78] sm:$0xff]
    %v275 = vld [vmem:[#allocation7 + $0x80] sm:$0xff]
    %v276 = vld [vmem:[#allocation7 + $0x88] sm:$0xff]
    %v277 = vld [vmem:[#allocation7 + $0x90] sm:$0xff]
    %v278 = vld [vmem:[#allocation7 + $0x98] sm:$0xff]
    %v279 = vld [vmem:[#allocation7 + $0xa0] sm:$0xff]
    %v280 = vld [vmem:[#allocation7 + $0xa8] sm:$0xff]
    %v281 = vld [vmem:[#allocation7 + $0xb0] sm:$0xff]
    %v282 = vld [vmem:[#allocation7 + $0xb8] sm:$0xff]
    %v283 = vld [vmem:[#allocation7 + $0xc0] sm:$0xff]
    %v284 = vld [vmem:[#allocation7 + $0xc8] sm:$0xff]
    %v285 = vld [vmem:[#allocation7 + $0xd0] sm:$0xff]
    %v286 = vld [vmem:[#allocation7 + $0xd8] sm:$0xff]
    %v287 = vld [vmem:[#allocation7 + $0xe0] sm:$0xff]
    %v288 = vld [vmem:[#allocation7 + $0xe8] sm:$0xff]
    %v289 = vld [vmem:[#allocation7 + $0xf0] sm:$0xff]
    %v290 = vld [vmem:[#allocation7 + $0xf8] sm:$0xff]
    %v291 = vld [vmem:[%s6] sm:$0x3]
    %v293 = vlaneseq
    %v294 = vshrl.u32 %v293, 7
    %v295 = vsub.s32 0, %v294
    %v296 = vrot.slane %v291, %v295
    %v297 = vlaneseq
    %v298 = vshrl.u32 %v297, 7
    %v299 = vsub.s32 1, %v298
    %v300 = vrot.slane %v291, %v299
    %303 = vmatprep.subr.mxu0 %v290
    %304 = vmatpush1.msra.mxu0 %v289
    %305 = vmatprep.subr.mxu0 %v288
    %306 = vmatpush1.msra.mxu0 %v287
    %307 = vmatprep.subr.mxu0 %v286
    %308 = vmatpush1.msra.mxu0 %v285
    %309 = vmatprep.subr.mxu0 %v284
    %310 = vmatpush1.msra.mxu0 %v283
    %311 = vmatprep.subr.mxu0 %v282
    %312 = vmatpush1.msra.mxu0 %v281
    %313 = vmatprep.subr.mxu0 %v280
    %314 = vmatpush1.msra.mxu0 %v279
    %315 = vmatprep.subr.mxu0 %v278
    %316 = vmatpush1.msra.mxu0 %v277
    %317 = vmatprep.subr.mxu0 %v276
    %318 = vmatpush1.msra.mxu0 %v275
    %319 = vmatprep.subr.mxu0 %v274
    %320 = vmatpush1.msra.mxu0 %v273
    %321 = vmatprep.subr.mxu0 %v272
    %322 = vmatpush1.msra.mxu0 %v271
    %323 = vmatprep.subr.mxu0 %v270
    %324 = vmatpush1.msra.mxu0 %v269
    %325 = vmatprep.subr.mxu0 %v268
    %326 = vmatpush1.msra.mxu0 %v267
    %327 = vmatprep.subr.mxu0 %v266
    %328 = vmatpush1.msra.mxu0 %v265
    %329 = vmatprep.subr.mxu0 %v264
    %330 = vmatpush1.msra.mxu0 %v263
    %331 = vmatprep.subr.mxu0 %v262
    %332 = vmatpush1.msra.mxu0 %v261
    %333 = vmatprep.subr.mxu0 %v260
    %334 = vmatpush1.msra.mxu0 %v259
    %335 = vmatprep.subr.mxu0 0.0
    %336 = vmatpush2.msra.mxu0 0.0
    %337 = vmatprep.subr.mxu0 0.0
    %338 = vmatpush2.msra.mxu0 0.0
    %339 = vmatprep.subr.mxu0 0.0
    %340 = vmatpush2.msra.mxu0 0.0
    %341 = vmatprep.subr.mxu0 0.0
    %342 = vmatpush2.msra.mxu0 0.0
    %343 = vmatprep.subr.mxu0 0.0
    %344 = vmatpush2.msra.mxu0 0.0
    %345 = vmatprep.subr.mxu0 0.0
    %346 = vmatpush2.msra.mxu0 0.0
    %347 = vmatprep.subr.mxu0 0.0
    %348 = vmatpush2.msra.mxu0 0.0
    %349 = vmatprep.subr.mxu0 0.0
    %350 = vmatpush2.msra.mxu0 0.0
    %351 = vmatprep.subr.mxu0 0.0
    %352 = vmatpush2.msra.mxu0 0.0
    %353 = vmatprep.subr.mxu0 0.0
    %354 = vmatpush2.msra.mxu0 0.0
    %355 = vmatprep.subr.mxu0 0.0
    %356 = vmatpush2.msra.mxu0 0.0
    %357 = vmatprep.subr.mxu0 0.0
    %358 = vmatpush2.msra.mxu0 0.0
    %359 = vmatprep.subr.mxu0 0.0
    %360 = vmatpush2.msra.mxu0 0.0
    %361 = vmatprep.subr.mxu0 0.0
    %362 = vmatpush2.msra.mxu0 0.0
    %363 = vmatprep.subr.mxu0 0.0
    %364 = vmatpush2.msra.mxu0 0.0
    %365 = vmatprep.subr.mxu0 0.0
    %366 = vmatpush2.msra.mxu0 0.0
    %367 = vmatprep.mubr.f32.mxu0 0.0
    %368 = vmatmul.mubr.f32.gmra.mxu0 %v258
    %v369 = vpop.f32.mrf.mxu0
    %v370 = vadd.f32 %v296, %v369
    %v371 = vpop.f32.mrf.mxu0
    %v372 = vadd.f32 %v300, %v371
    %373 = vdwg.mxu0
    %v374 = vxor.u32 %v370, 2147483648
    %v375 = vxor.u32 %v372, 2147483648
    %v376 = vmul.f32 %v374, 1.442695
    %v377 = vpow.pop %v376
    %v378 = vmul.f32 %v375, 1.442695
    %v379 = vpow.pop %v378
    %v380 = vadd.f32 %v377, 1.0
    %v381 = vadd.f32 %v379, 1.0
    %v382 = vrcp.pop %v380
    %v383 = vmul.f32 1.0, %v382
    %v384 = vrcp.pop %v381
    %v385 = vmul.f32 1.0, %v384
    %386 = vst [vmem:[%s7] sm:$0xff] %v383
    %387 = vst [vmem:[%s7 + $0x8] sm:$0xff] %v385
    // Predicated region
    $region46: #{generator_forward.1} parent=1 // pred_check
      _
    $region47: #{generator_forward.1} parent=1 // pred_check_branch
      %389 = sbr.rel (0) target = $region49
    $region48: #{generator_forward.1} parent=1 // pred_region
      _
    $region49: #{generator_forward.1} parent=1 // pred_fallthru
      _
    // Predicated region
    $region50: #{generator_forward.1} parent=1 // pred_check
      _
    $region51: #{generator_forward.1} parent=1 // pred_check_branch
      %391 = sbr.rel (0) target = $region53
    $region52: #{generator_forward.1} parent=1 // pred_region
      _
    $region53: #{generator_forward.1} parent=1 // pred_fallthru
      _
    %392 = vsyncpa [#allocation3], 1
    %393 = vsyncpa [#allocation5], 1
    %394 = vsyncpa [#allocation8], 1

</llo_original>
